<compile_context>
chip_gen: v5e
topology: v5e:2x2
jax: 0.10.0
libtpu: 0.0.40
codegen_flags: <defaults>
</compile_context>

<pallas_src>
import jax
import jax.numpy as jnp
from jax.experimental import pallas as pl
from jax.experimental.pallas import tpu as pltpu


def _round_up(x: int, m: int) -> int:
    return ((x + m - 1) // m) * m


def _choose_tile(batch: int, block_rows: int):
    """Adaptive batch tile: >=2 grid steps (v7x megacore) and minimal pad waste."""
    n_tiles = max(2, -(-batch // block_rows))
    tb = _round_up(-(-batch // n_tiles), 8)
    b_pad = _round_up(batch, tb)
    return tb, b_pad


# ----------------------------------------------------------------------------
# Pallas kernel: one batch tile per grid step
# ----------------------------------------------------------------------------
def _glideator_kernel(
    f_ref,      # (TB, D)   f32  features, zero in the last E (embedding) columns
    ids_ref,    # (TB, 1)   i32  launch ids
    emb_ref,    # (NL, D)   f32  embedding table, zero in the first F columns
    wc_ref,     # (L, D)    f32  cross weights
    bc_ref,     # (L, D)    f32  cross biases
    w1_ref,     # (D, H1)   bf16 deep layer 1 weight
    b1_ref,     # (1, H1)   f32
    w2_ref,     # (H1, H2)  bf16 deep layer 2 weight
    b2_ref,     # (1, H2)   f32
    woc_ref,    # (D, Tp)   bf16 output-head weight acting on cross output
    wod_ref,    # (H2, Tp)  bf16 output-head weight acting on deep output
    bo_ref,     # (1, Tp)   f32  output-head bias (zero-padded past num_targets)
    out_ref,    # (TB, Tp)  f32
):
    tb = f_ref.shape[0]
    nl = emb_ref.shape[0]

    # ----- in-kernel embedding gather (exact one-hot MXU matmul) -------------
    # TODO(synk): for very large embedding tables switch to a DMA gather / jnp.take
    # on the VMEM table instead of the one-hot matmul.
    ids = ids_ref[...]                                                   # (TB, 1)
    onehot = (ids == jax.lax.broadcasted_iota(jnp.int32, (tb, nl), 1)
              ).astype(jnp.float32)                                      # (TB, NL)
    # features are zero-padded in the embedding columns and the table is zero-padded
    # in the feature columns, so this sum equals torch.cat([features, emb], -1).
    x0 = f_ref[...] + jnp.dot(onehot, emb_ref[...],
                              preferred_element_type=jnp.float32)        # (TB, D)

    # ----- cross net (f32): x_{l+1} = x0 * (x_l . w_l) + b_l + x_l -----------
    wc = wc_ref[...]
    bc = bc_ref[...]
    xl = x0
    for l in range(wc_ref.shape[0]):
        s = jnp.sum(xl * wc[l:l + 1, :], axis=-1, keepdims=True)         # (TB, 1)
        xl = x0 * s + bc[l:l + 1, :] + xl

    # ----- deep net: two Linear + ReLU (bf16 MXU inputs, f32 accumulate) -----
    h1 = jnp.maximum(
        jnp.dot(x0.astype(jnp.bfloat16), w1_ref[...],
                preferred_element_type=jnp.float32) + b1_ref[...], 0.0)   # (TB, H1)
    h2 = jnp.maximum(
        jnp.dot(h1.astype(jnp.bfloat16), w2_ref[...],
                preferred_element_type=jnp.float32) + b2_ref[...], 0.0)   # (TB, H2)

    # ----- output heads: sigmoid(Linear(concat([cross, deep]))) --------------
    # concat([cross, deep]) @ W_out == cross @ W_out[:D] + deep @ W_out[D:]
    logits = (
        jnp.dot(xl.astype(jnp.bfloat16), woc_ref[...],
                preferred_element_type=jnp.float32)
        + jnp.dot(h2.astype(jnp.bfloat16), wod_ref[...],
                  preferred_element_type=jnp.float32)
        + bo_ref[...]
    )                                                                     # (TB, Tp)
    out_ref[...] = jax.nn.sigmoid(logits)


# ----------------------------------------------------------------------------
# Wrapper
# ----------------------------------------------------------------------------
def glideator_forward(features, launch_ids, kernel_params, *, block_rows=2048):
    """features: (B, F) f32, launch_ids: (B,) int -> (B, num_targets) f32."""
    kp = kernel_params
    table = kp["emb_table"]                       # (NL, D), feature columns zeroed
    _, D = table.shape
    F = kp["input_dim"]
    E = D - F
    T = kp["num_targets"]
    TP = kp["b_out"].shape[-1]                    # small padded head width (mult of 8)

    B = features.shape[0]
    # Zero-pad the feature columns up to D (the embedding columns); tiny extra bytes,
    # removes any in-kernel concat.
    features = jnp.pad(features.astype(jnp.float32), ((0, 0), (0, E)))    # (B, D)
    ids = launch_ids.astype(jnp.int32).reshape(B, 1)                      # (B, 1)

    TB, B_pad = _choose_tile(B, block_rows)
    if B_pad != B:
        pad = B_pad - B
        features = jnp.pad(features, ((0, pad), (0, 0)))
        ids = jnp.pad(ids, ((0, pad), (0, 0)))                            # id 0 is valid
    grid = (B_pad // TB,)

    def batch_spec(cols):
        return pl.BlockSpec((TB, cols), lambda i: (i, 0))

    def const_spec(arr):
        # TODO(synk): pipeline_mode=pl.Buffered(1) would drop the redundant second
        # buffer for these grid-invariant weights once that path is proven stable.
        return pl.BlockSpec(arr.shape, lambda i: (0, 0))

    weights = (
        table, kp["w_cross"], kp["b_cross"],
        kp["w1"], kp["b1"], kp["w2"], kp["b2"],
        kp["w_out_c"], kp["w_out_d"], kp["b_out"],
    )

    out = pl.pallas_call(
        _glideator_kernel,
        out_shape=jax.ShapeDtypeStruct((B_pad, TP), jnp.float32),
        grid=grid,
        in_specs=[batch_spec(D), batch_spec(1)] + [const_spec(w) for w in weights],
        out_specs=pl.BlockSpec((TB, TP), lambda i: (i, 0)),
        compiler_params=pltpu.CompilerParams(
            dimension_semantics=("parallel",),     # shard batch tiles across TCs (v7x)
            vmem_limit_bytes=32 * 1024 * 1024,     # tiles are ~100s of KB; ample headroom
        ),
    )(features, ids, *weights)

    return out[:B, :T]


# ----------------------------------------------------------------------------
# Deterministic "natural" parameters (mirrors the torch module layout)
# ----------------------------------------------------------------------------
def init_params(key, *, input_dim, num_launches, launch_embedding_dim,
                num_targets=3, deep_hidden_units=(64, 32), cross_layers=2):
    D = input_dim + launch_embedding_dim
    H1, H2 = deep_hidden_units
    ks = jax.random.split(key, 9)
    scale = 0.1
    return {
        "embedding": scale * jax.random.normal(ks[0], (num_launches, launch_embedding_dim), jnp.float32),
        "w_cross":   scale * jax.random.normal(ks[1], (cross_layers, D), jnp.float32),
        "b_cross":   scale * jax.random.normal(ks[2], (cross_layers, D), jnp.float32),
        "w1":        scale * jax.random.normal(ks[3], (D, H1), jnp.float32),
        "b1":        scale * jax.random.normal(ks[4], (1, H1), jnp.float32),
        "w2":        scale * jax.random.normal(ks[5], (H1, H2), jnp.float32),
        "b2":        scale * jax.random.normal(ks[6], (1, H2), jnp.float32),
        # Per-target Linear(D + H2, 1) heads stacked along the last axis.
        "w_out":     scale * jax.random.normal(ks[7], (D + H2, num_targets), jnp.float32),
        "b_out":     scale * jax.random.normal(ks[8], (1, num_targets), jnp.float32),
    }


def pack_params(params, *, input_dim, num_targets):
    """Convert 'natural' params into the kernel layout:
    zero-pad the embedding table to width D (concat-free x0), cast matmul weights
    to bf16, pad the heads to a small (8-wide) output width."""
    F = input_dim
    D = params["w_cross"].shape[-1]
    T = num_targets
    TP = _round_up(T, 8)                       # small pad; block == full last dim

    def pad_t(w):                               # zero-pad last dim T -> TP
        return jnp.pad(w, ((0, 0), (0, TP - T)))

    w_out = params["w_out"]                     # (D + H2, T), rows ordered [cross(D), deep(H2)]
    emb = params["embedding"].astype(jnp.float32)
    return {
        "emb_table":  jnp.pad(emb, ((0, 0), (F, 0))),          # (NL, D), zeros in feature cols
        "w_cross":    params["w_cross"].astype(jnp.float32),
        "b_cross":    params["b_cross"].astype(jnp.float32),
        "w1":         params["w1"].astype(jnp.bfloat16),
        "b1":         params["b1"].astype(jnp.float32),
        "w2":         params["w2"].astype(jnp.bfloat16),
        "b2":         params["b2"].astype(jnp.float32),
        "w_out_c":    pad_t(w_out[:D]).astype(jnp.bfloat16),
        "w_out_d":    pad_t(w_out[D:]).astype(jnp.bfloat16),
        "b_out":      pad_t(params["b_out"]).astype(jnp.float32),
        "num_targets": T,
        "input_dim":  F,
    }


# ----------------------------------------------------------------------------
# Pure-JAX f32 reference (module semantics) for a sanity check
# ----------------------------------------------------------------------------
def glideator_ref(features, launch_ids, params):
    emb = jnp.take(params["embedding"], launch_ids, axis=0)
    x0 = jnp.concatenate([features, emb], axis=-1).astype(jnp.float32)
    xl = x0
    for l in range(params["w_cross"].shape[0]):
        s = jnp.sum(xl * params["w_cross"][l][None, :], axis=-1, keepdims=True)
        xl = x0 * s + params["b_cross"][l][None, :] + xl
    h1 = jnp.maximum(x0 @ params["w1"] + params["b1"], 0.0)
    h2 = jnp.maximum(h1 @ params["w2"] + params["b2"], 0.0)
    logits = jnp.concatenate([xl, h2], axis=-1) @ params["w_out"] + params["b_out"]
    return jax.nn.sigmoid(logits)


if __name__ == "__main__":
    B = 20                    # not a multiple of 8 -> exercises batch padding
    input_dim = 8
    launch_embedding_dim = 4
    num_launches = 10
    num_targets = 3

    key = jax.random.PRNGKey(0)
    k_feat, k_ids, k_params = jax.random.split(key, 3)

    features = jax.random.normal(k_feat, (B, input_dim), jnp.float32)
    launch_ids = jax.random.randint(k_ids, (B,), 0, num_launches, jnp.int32)

    params = init_params(
        k_params,
        input_dim=input_dim,
        num_launches=num_launches,
        launch_embedding_dim=launch_embedding_dim,
        num_targets=num_targets,
        deep_hidden_units=(64, 32),
        cross_layers=2,
    )
    kparams = pack_params(params, input_dim=input_dim, num_targets=num_targets)

    ref = glideator_ref(features, launch_ids, params)

    # Default (large) tiles: adaptive TB still yields a 2-step grid here.
    out = jax.block_until_ready(glideator_forward(features, launch_ids, kparams))
    assert out.shape == (B, num_targets), out.shape
    # bf16 MXU matmuls (f32 accumulate) vs f32 reference -> loosened tolerance.
    assert jnp.allclose(out, ref, atol=1e-2), jnp.max(jnp.abs(out - ref))

    # Small tiles: exercises a longer grid and row padding.
    out_small = jax.block_until_ready(
        glideator_forward(features, launch_ids, kparams, block_rows=8))
    assert out_small.shape == (B, num_targets), out_small.shape
    assert jnp.allclose(out_small, ref, atol=1e-2), jnp.max(jnp.abs(out_small - ref))

    print("KERNEL_OK")
</pallas_src>

<mosaic_0001>
module attributes {stable_mosaic.version = 11 : i64} {
  func.func @_glideator_kernel(%arg0: i32, %arg1: memref<16x12xf32, #tpu.memory_space<vmem>>, %arg2: memref<16x1xi32, #tpu.memory_space<vmem>>, %arg3: memref<10x12xf32, #tpu.memory_space<vmem>>, %arg4: memref<2x12xf32, #tpu.memory_space<vmem>>, %arg5: memref<2x12xf32, #tpu.memory_space<vmem>>, %arg6: memref<12x64xbf16, #tpu.memory_space<vmem>>, %arg7: memref<1x64xf32, #tpu.memory_space<vmem>>, %arg8: memref<64x32xbf16, #tpu.memory_space<vmem>>, %arg9: memref<1x32xf32, #tpu.memory_space<vmem>>, %arg10: memref<12x8xbf16, #tpu.memory_space<vmem>>, %arg11: memref<32x8xbf16, #tpu.memory_space<vmem>>, %arg12: memref<1x8xf32, #tpu.memory_space<vmem>>, %arg13: memref<16x8xf32, #tpu.memory_space<vmem>>) attributes {dimension_semantics = [#tpu.dimension_semantics<parallel>], iteration_bounds = array<i64: 2>, scalar_prefetch = 0 : i64, scratch_operands = 0 : i64, tpu.core_type = #tpu.core_type<tc>, window_params = [{transform_indices = @transform_0, window_bounds = array<i64: 16, 12>}, {transform_indices = @transform_1, window_bounds = array<i64: 16, 1>}, {pipeline_mode = #tpu.pipeline_mode<synchronous>, transform_indices = @transform_2, window_bounds = array<i64: 10, 12>}, {pipeline_mode = #tpu.pipeline_mode<synchronous>, transform_indices = @transform_3, window_bounds = array<i64: 2, 12>}, {pipeline_mode = #tpu.pipeline_mode<synchronous>, transform_indices = @transform_4, window_bounds = array<i64: 2, 12>}, {pipeline_mode = #tpu.pipeline_mode<synchronous>, transform_indices = @transform_5, window_bounds = array<i64: 12, 64>}, {pipeline_mode = #tpu.pipeline_mode<synchronous>, transform_indices = @transform_6, window_bounds = array<i64: 1, 64>}, {pipeline_mode = #tpu.pipeline_mode<synchronous>, transform_indices = @transform_7, window_bounds = array<i64: 64, 32>}, {pipeline_mode = #tpu.pipeline_mode<synchronous>, transform_indices = @transform_8, window_bounds = array<i64: 1, 32>}, {pipeline_mode = #tpu.pipeline_mode<synchronous>, transform_indices = @transform_9, window_bounds = array<i64: 12, 8>}, {pipeline_mode = #tpu.pipeline_mode<synchronous>, transform_indices = @transform_10, window_bounds = array<i64: 32, 8>}, {pipeline_mode = #tpu.pipeline_mode<synchronous>, transform_indices = @transform_11, window_bounds = array<i64: 1, 8>}, {transform_indices = @transform_12, window_bounds = array<i64: 16, 8>}]} {
    %c0 = arith.constant 0 : index
    %c0_0 = arith.constant 0 : index
    %0 = vector.load %arg2[%c0, %c0_0] : memref<16x1xi32, #tpu.memory_space<vmem>>, vector<16x1xi32>
    %1 = tpu.iota {dimensions = array<i32: 1>} : vector<16x10xi32>
    %2 = vector.broadcast %0 : vector<16x1xi32> to vector<16x10xi32>
    %3 = arith.cmpi eq, %2, %1 : vector<16x10xi32>
    %4 = arith.extui %3 : vector<16x10xi1> to vector<16x10xi32>
    %5 = arith.sitofp %4 : vector<16x10xi32> to vector<16x10xf32>
    %c0_1 = arith.constant 0 : index
    %c0_2 = arith.constant 0 : index
    %6 = vector.load %arg1[%c0_1, %c0_2] : memref<16x12xf32, #tpu.memory_space<vmem>>, vector<16x12xf32>
    %c0_3 = arith.constant 0 : index
    %c0_4 = arith.constant 0 : index
    %7 = vector.load %arg3[%c0_3, %c0_4] : memref<10x12xf32, #tpu.memory_space<vmem>>, vector<10x12xf32>
    %cst = arith.constant dense<0.000000e+00> : vector<16x12xf32>
    %8 = tpu.matmul %5, %7, %cst {dimension_numbers = #tpu.dot_dimension_numbers<[1], [0], [0], [1], [0, 0, 1, 1], [], []>} : vector<16x10xf32>, vector<10x12xf32>, vector<16x12xf32> -> vector<16x12xf32>
    %9 = arith.addf %6, %8 : vector<16x12xf32>
    %c0_5 = arith.constant 0 : index
    %c0_6 = arith.constant 0 : index
    %10 = vector.load %arg4[%c0_5, %c0_6] : memref<2x12xf32, #tpu.memory_space<vmem>>, vector<2x12xf32>
    %c0_7 = arith.constant 0 : index
    %c0_8 = arith.constant 0 : index
    %11 = vector.load %arg5[%c0_7, %c0_8] : memref<2x12xf32, #tpu.memory_space<vmem>>, vector<2x12xf32>
    %12 = vector.extract_strided_slice %10 {offsets = [0, 0], sizes = [1, 12], strides = [1, 1]} : vector<2x12xf32> to vector<1x12xf32>
    %13 = vector.broadcast %12 : vector<1x12xf32> to vector<16x12xf32>
    %14 = arith.mulf %9, %13 : vector<16x12xf32>
    %cst_9 = arith.constant dense<0.000000e+00> : vector<16xf32>
    %15 = vector.multi_reduction <add>, %14, %cst_9 [1] : vector<16x12xf32> to vector<16xf32>
    %16 = vector.shape_cast %15 : vector<16xf32> to vector<16x1xf32>
    %17 = vector.broadcast %16 : vector<16x1xf32> to vector<16x12xf32>
    %18 = arith.mulf %9, %17 : vector<16x12xf32>
    %19 = vector.extract_strided_slice %11 {offsets = [0, 0], sizes = [1, 12], strides = [1, 1]} : vector<2x12xf32> to vector<1x12xf32>
    %20 = vector.broadcast %19 : vector<1x12xf32> to vector<16x12xf32>
    %21 = arith.addf %18, %20 : vector<16x12xf32>
    %22 = arith.addf %21, %9 : vector<16x12xf32>
    %23 = vector.extract_strided_slice %10 {offsets = [1, 0], sizes = [1, 12], strides = [1, 1]} : vector<2x12xf32> to vector<1x12xf32>
    %24 = vector.broadcast %23 : vector<1x12xf32> to vector<16x12xf32>
    %25 = arith.mulf %22, %24 : vector<16x12xf32>
    %cst_10 = arith.constant dense<0.000000e+00> : vector<16xf32>
    %26 = vector.multi_reduction <add>, %25, %cst_10 [1] : vector<16x12xf32> to vector<16xf32>
    %27 = vector.shape_cast %26 : vector<16xf32> to vector<16x1xf32>
    %28 = vector.broadcast %27 : vector<16x1xf32> to vector<16x12xf32>
    %29 = arith.mulf %9, %28 : vector<16x12xf32>
    %30 = vector.extract_strided_slice %11 {offsets = [1, 0], sizes = [1, 12], strides = [1, 1]} : vector<2x12xf32> to vector<1x12xf32>
    %31 = vector.broadcast %30 : vector<1x12xf32> to vector<16x12xf32>
    %32 = arith.addf %29, %31 : vector<16x12xf32>
    %33 = arith.addf %32, %22 : vector<16x12xf32>
    %34 = arith.truncf %9 : vector<16x12xf32> to vector<16x12xbf16>
    %c0_11 = arith.constant 0 : index
    %c0_12 = arith.constant 0 : index
    %35 = vector.load %arg6[%c0_11, %c0_12] : memref<12x64xbf16, #tpu.memory_space<vmem>>, vector<12x64xbf16>
    %cst_13 = arith.constant dense<0.000000e+00> : vector<16x64xf32>
    %36 = tpu.matmul %34, %35, %cst_13 {dimension_numbers = #tpu.dot_dimension_numbers<[1], [0], [0], [1], [0, 0, 1, 1], [], []>} : vector<16x12xbf16>, vector<12x64xbf16>, vector<16x64xf32> -> vector<16x64xf32>
    %c0_14 = arith.constant 0 : index
    %c0_15 = arith.constant 0 : index
    %37 = vector.load %arg7[%c0_14, %c0_15] : memref<1x64xf32, #tpu.memory_space<vmem>>, vector<1x64xf32>
    %38 = vector.broadcast %37 : vector<1x64xf32> to vector<16x64xf32>
    %39 = arith.addf %36, %38 : vector<16x64xf32>
    %cst_16 = arith.constant 0.000000e+00 : f32
    %40 = vector.broadcast %cst_16 : f32 to vector<16x64xf32>
    %41 = arith.maximumf %39, %40 : vector<16x64xf32>
    %42 = arith.truncf %41 : vector<16x64xf32> to vector<16x64xbf16>
    %c0_17 = arith.constant 0 : index
    %c0_18 = arith.constant 0 : index
    %43 = vector.load %arg8[%c0_17, %c0_18] : memref<64x32xbf16, #tpu.memory_space<vmem>>, vector<64x32xbf16>
    %cst_19 = arith.constant dense<0.000000e+00> : vector<16x32xf32>
    %44 = tpu.matmul %42, %43, %cst_19 {dimension_numbers = #tpu.dot_dimension_numbers<[1], [0], [0], [1], [0, 0, 1, 1], [], []>} : vector<16x64xbf16>, vector<64x32xbf16>, vector<16x32xf32> -> vector<16x32xf32>
    %c0_20 = arith.constant 0 : index
    %c0_21 = arith.constant 0 : index
    %45 = vector.load %arg9[%c0_20, %c0_21] : memref<1x32xf32, #tpu.memory_space<vmem>>, vector<1x32xf32>
    %46 = vector.broadcast %45 : vector<1x32xf32> to vector<16x32xf32>
    %47 = arith.addf %44, %46 : vector<16x32xf32>
    %cst_22 = arith.constant 0.000000e+00 : f32
    %48 = vector.broadcast %cst_22 : f32 to vector<16x32xf32>
    %49 = arith.maximumf %47, %48 : vector<16x32xf32>
    %50 = arith.truncf %33 : vector<16x12xf32> to vector<16x12xbf16>
    %c0_23 = arith.constant 0 : index
    %c0_24 = arith.constant 0 : index
    %51 = vector.load %arg10[%c0_23, %c0_24] : memref<12x8xbf16, #tpu.memory_space<vmem>>, vector<12x8xbf16>
    %cst_25 = arith.constant dense<0.000000e+00> : vector<16x8xf32>
    %52 = tpu.matmul %50, %51, %cst_25 {dimension_numbers = #tpu.dot_dimension_numbers<[1], [0], [0], [1], [0, 0, 1, 1], [], []>} : vector<16x12xbf16>, vector<12x8xbf16>, vector<16x8xf32> -> vector<16x8xf32>
    %53 = arith.truncf %49 : vector<16x32xf32> to vector<16x32xbf16>
    %c0_26 = arith.constant 0 : index
    %c0_27 = arith.constant 0 : index
    %54 = vector.load %arg11[%c0_26, %c0_27] : memref<32x8xbf16, #tpu.memory_space<vmem>>, vector<32x8xbf16>
    %cst_28 = arith.constant dense<0.000000e+00> : vector<16x8xf32>
    %55 = tpu.matmul %53, %54, %cst_28 {dimension_numbers = #tpu.dot_dimension_numbers<[1], [0], [0], [1], [0, 0, 1, 1], [], []>} : vector<16x32xbf16>, vector<32x8xbf16>, vector<16x8xf32> -> vector<16x8xf32>
    %56 = arith.addf %52, %55 : vector<16x8xf32>
    %c0_29 = arith.constant 0 : index
    %c0_30 = arith.constant 0 : index
    %57 = vector.load %arg12[%c0_29, %c0_30] : memref<1x8xf32, #tpu.memory_space<vmem>>, vector<1x8xf32>
    %58 = vector.broadcast %57 : vector<1x8xf32> to vector<16x8xf32>
    %59 = arith.addf %56, %58 : vector<16x8xf32>
    %60 = arith.negf %59 : vector<16x8xf32>
    %61 = math.exp %60 : vector<16x8xf32>
    %cst_31 = arith.constant 1.000000e+00 : f32
    %62 = vector.broadcast %cst_31 : f32 to vector<16x8xf32>
    %63 = arith.addf %62, %61 : vector<16x8xf32>
    %64 = arith.divf %62, %63 : vector<16x8xf32>
    %c0_32 = arith.constant 0 : index
    %c0_33 = arith.constant 0 : index
    %65 = vector.load %arg13[%c0_32, %c0_33] : memref<16x8xf32, #tpu.memory_space<vmem>>, vector<16x8xf32>
    tpu.vector_store %arg13[%c0_32, %c0_33], %64 {strides = array<i32>} : memref<16x8xf32, #tpu.memory_space<vmem>>, vector<16x8xf32>,
    return
  }
  func.func @transform_0(%arg0: i32) -> (i32, i32) {
    %c0_i32 = arith.constant 0 : i32
    %c0_i32_0 = arith.constant 0 : i32
    return %arg0, %c0_i32 : i32, i32
  }
  func.func @transform_1(%arg0: i32) -> (i32, i32) {
    %c0_i32 = arith.constant 0 : i32
    %c0_i32_0 = arith.constant 0 : i32
    return %arg0, %c0_i32 : i32, i32
  }
  func.func @transform_2(%arg0: i32) -> (i32, i32) {
    %c0_i32 = arith.constant 0 : i32
    %c0_i32_0 = arith.constant 0 : i32
    %c0_i32_1 = arith.constant 0 : i32
    return %c0_i32, %c0_i32_0 : i32, i32
  }
  func.func @transform_3(%arg0: i32) -> (i32, i32) {
    %c0_i32 = arith.constant 0 : i32
    %c0_i32_0 = arith.constant 0 : i32
    %c0_i32_1 = arith.constant 0 : i32
    return %c0_i32, %c0_i32_0 : i32, i32
  }
  func.func @transform_4(%arg0: i32) -> (i32, i32) {
    %c0_i32 = arith.constant 0 : i32
    %c0_i32_0 = arith.constant 0 : i32
    %c0_i32_1 = arith.constant 0 : i32
    return %c0_i32, %c0_i32_0 : i32, i32
  }
  func.func @transform_5(%arg0: i32) -> (i32, i32) {
    %c0_i32 = arith.constant 0 : i32
    %c0_i32_0 = arith.constant 0 : i32
    %c0_i32_1 = arith.constant 0 : i32
    return %c0_i32, %c0_i32_0 : i32, i32
  }
  func.func @transform_6(%arg0: i32) -> (i32, i32) {
    %c0_i32 = arith.constant 0 : i32
    %c0_i32_0 = arith.constant 0 : i32
    %c0_i32_1 = arith.constant 0 : i32
    return %c0_i32, %c0_i32_0 : i32, i32
  }
  func.func @transform_7(%arg0: i32) -> (i32, i32) {
    %c0_i32 = arith.constant 0 : i32
    %c0_i32_0 = arith.constant 0 : i32
    %c0_i32_1 = arith.constant 0 : i32
    return %c0_i32, %c0_i32_0 : i32, i32
  }
  func.func @transform_8(%arg0: i32) -> (i32, i32) {
    %c0_i32 = arith.constant 0 : i32
    %c0_i32_0 = arith.constant 0 : i32
    %c0_i32_1 = arith.constant 0 : i32
    return %c0_i32, %c0_i32_0 : i32, i32
  }
  func.func @transform_9(%arg0: i32) -> (i32, i32) {
    %c0_i32 = arith.constant 0 : i32
    %c0_i32_0 = arith.constant 0 : i32
    %c0_i32_1 = arith.constant 0 : i32
    return %c0_i32, %c0_i32_0 : i32, i32
  }
  func.func @transform_10(%arg0: i32) -> (i32, i32) {
    %c0_i32 = arith.constant 0 : i32
    %c0_i32_0 = arith.constant 0 : i32
    %c0_i32_1 = arith.constant 0 : i32
    return %c0_i32, %c0_i32_0 : i32, i32
  }
  func.func @transform_11(%arg0: i32) -> (i32, i32) {
    %c0_i32 = arith.constant 0 : i32
    %c0_i32_0 = arith.constant 0 : i32
    %c0_i32_1 = arith.constant 0 : i32
    return %c0_i32, %c0_i32_0 : i32, i32
  }
  func.func @transform_12(%arg0: i32) -> (i32, i32) {
    %c0_i32 = arith.constant 0 : i32
    %c0_i32_0 = arith.constant 0 : i32
    return %arg0, %c0_i32 : i32, i32
  }
}

</mosaic_0001>

<llo_original>
// kernel: tpu_custom_call.1
$region0: #{tpu_custom_call.1}
  #allocation0 [shape = 'u32[]', space=smem, size = 0x4, offset = 0x4, fixed_abs, tag = 'smem constant byte address 0x4 - core index']
  #allocation1 [shape = 'u32[72,128]{1,0:T(1,128)}', space=vmem, size = 0x9000, scoped, tag = 'internal scratch']
  %s0 = inlined_call_operand.vmem [shape: f32[32,12], index: 0, kind: input, shape index: {}]
  %s1 = inlined_call_operand.vmem [shape: s32[32,1], index: 1, kind: input, shape index: {}]
  %s2 = inlined_call_operand.vmem [shape: f32[10,12], index: 2, kind: input, shape index: {}]
  %s3 = inlined_call_operand.vmem [shape: f32[2,12], index: 3, kind: input, shape index: {}]
  %s4 = inlined_call_operand.vmem [shape: f32[2,12], index: 4, kind: input, shape index: {}]
  %s5 = inlined_call_operand.vmem [shape: bf16[12,64], index: 5, kind: input, shape index: {}]
  %s6 = inlined_call_operand.vmem [shape: f32[1,64], index: 6, kind: input, shape index: {}]
  %s7 = inlined_call_operand.vmem [shape: bf16[64,32], index: 7, kind: input, shape index: {}]
  %s8 = inlined_call_operand.vmem [shape: f32[1,32], index: 8, kind: input, shape index: {}]
  %s9 = inlined_call_operand.vmem [shape: bf16[12,8], index: 9, kind: input, shape index: {}]
  %s10 = inlined_call_operand.vmem [shape: bf16[32,8], index: 10, kind: input, shape index: {}]
  %s11 = inlined_call_operand.vmem [shape: f32[1,8], index: 11, kind: input, shape index: {}]
  %s12 = inlined_call_operand.vmem [shape: f32[32,8], index: 12, kind: output, shape index: {}]
  %s13 = sld [smem:[#allocation0]]
  $region81: #{tpu_custom_call.1} parent=0
    _
  %s15 = ssub.s32 1, %s13
  %s16 = scalar_select 0, %s15, %s13
  loop: start=0, step=1, limit=4
  $region2: #{tpu_custom_call.1} parent=0 // loop_pre_header
    _
  $region3: #{tpu_custom_call.1} parent=0 // loop_header
    %s18 = sphi 0, %s22
    %p19 = scmp.ge.s32.totalorder %s18, 4
    %s28 = sphi 0, %s30
    %s31 = sphi 0, %s28
    %s32 = sphi 0, %s31
    %s48 = sphi 0, %s32
    %s54 = sphi 0, %s56
    %s57 = sphi 0, %s54
    %s58 = sphi 0, %s57
    %s74 = sphi 0, %s58
    %s78 = sphi 0, %s78
    %s80 = sphi 0, %s78
    %s81 = sphi 0, %s80
    %s95 = sphi 0, %s81
    %s99 = sphi 0, %s99
    %s101 = sphi 0, %s99
    %s102 = sphi 0, %s101
    %s116 = sphi 0, %s102
    %s120 = sphi 0, %s120
    %s122 = sphi 0, %s120
    %s123 = sphi 0, %s122
    %s137 = sphi 0, %s123
    %s141 = sphi 0, %s141
    %s143 = sphi 0, %s141
    %s144 = sphi 0, %s143
    %s158 = sphi 0, %s144
    %s162 = sphi 0, %s162
    %s164 = sphi 0, %s162
    %s165 = sphi 0, %s164
    %s179 = sphi 0, %s165
    %s183 = sphi 0, %s183
    %s185 = sphi 0, %s183
    %s186 = sphi 0, %s185
    %s200 = sphi 0, %s186
    %s204 = sphi 0, %s204
    %s206 = sphi 0, %s204
    %s207 = sphi 0, %s206
    %s221 = sphi 0, %s207
    %s225 = sphi 0, %s225
    %s227 = sphi 0, %s225
    %s228 = sphi 0, %s227
    %s242 = sphi 0, %s228
    %s246 = sphi 0, %s246
    %s248 = sphi 0, %s246
    %s249 = sphi 0, %s248
    %s263 = sphi 0, %s249
    %s267 = sphi 0, %s267
    %s269 = sphi 0, %s267
    %s270 = sphi 0, %s269
    %s284 = sphi 0, %s270
    %s290 = sphi 0, %s292
    %s293 = sphi 0, %s290
    %s294 = sphi 0, %s293
    %s310 = sphi 0, %s294
  $region4: #{tpu_custom_call.1} parent=0 // loop_header_branch
    %21 = sbr.rel (%p19) target = $region8
  $region5: #{tpu_custom_call.1} parent=0 // loop_body
    %s23 = ssub.s32 %s18, 1
    %s24 = ssub.s32 %s18, 2
    %s25 = sadd.s32 %s18, 1
    %s26 = ssub.s32 %s18, %s25
    %p27 = scmp.eq.s32.totalorder %s26, 0
    %s29 = sadd.s32 %s28, 1
    %s30 = scalar_select %p27, %s28, %s29
    %p33 = pneg %p27
    %p34 = scmp.eq.s32.totalorder %s18, 1
    %p35 = por %p33, %p34
    %p36 = scmp.ne.s32.totalorder %s28, %s31
    %p37 = scmp.eq.s32.totalorder %s18, 0
    %p38 = por %p36, %p37
    %p39 = scmp.ne.s32.totalorder %s28, %s31
    %p40 = scmp.eq.s32.totalorder %s23, 1
    %p41 = por %p39, %p40
    %p42 = scmp.ne.s32.totalorder %s31, %s32
    %p43 = scmp.eq.s32.totalorder %s23, 0
    %p44 = por %p42, %p43
    %p45 = scmp.ne.s32.totalorder %s31, %s32
    %p46 = scmp.eq.s32.totalorder %s24, 1
    %p47 = por %p45, %p46
    %p49 = scmp.ne.s32.totalorder %s32, %s48
    %p50 = scmp.eq.s32.totalorder %s24, 0
    %p51 = por %p49, %p50
    %s52 = ssub.s32 %s18, %s25
    %p53 = scmp.eq.s32.totalorder %s52, 0
    %s55 = sadd.s32 %s54, 1
    %s56 = scalar_select %p53, %s54, %s55
    %p59 = pneg %p53
    %p60 = scmp.eq.s32.totalorder %s18, 1
    %p61 = por %p59, %p60
    %p62 = scmp.ne.s32.totalorder %s54, %s57
    %p63 = scmp.eq.s32.totalorder %s18, 0
    %p64 = por %p62, %p63
    %p65 = scmp.ne.s32.totalorder %s54, %s57
    %p66 = scmp.eq.s32.totalorder %s23, 1
    %p67 = por %p65, %p66
    %p68 = scmp.ne.s32.totalorder %s57, %s58
    %p69 = scmp.eq.s32.totalorder %s23, 0
    %p70 = por %p68, %p69
    %p71 = scmp.ne.s32.totalorder %s57, %s58
    %p72 = scmp.eq.s32.totalorder %s24, 1
    %p73 = por %p71, %p72
    %p75 = scmp.ne.s32.totalorder %s58, %s74
    %p76 = scmp.eq.s32.totalorder %s24, 0
    %p77 = por %p75, %p76
    %s79 = sadd.s32 %s78, 1
    %p82 = scmp.eq.s32.totalorder %s18, 1
    %p83 = scmp.ne.s32.totalorder %s78, %s80
    %p84 = scmp.eq.s32.totalorder %s18, 0
    %p85 = por %p83, %p84
    %p86 = scmp.ne.s32.totalorder %s78, %s80
    %p87 = scmp.eq.s32.totalorder %s23, 1
    %p88 = por %p86, %p87
    %p89 = scmp.ne.s32.totalorder %s80, %s81
    %p90 = scmp.eq.s32.totalorder %s23, 0
    %p91 = por %p89, %p90
    %p92 = scmp.ne.s32.totalorder %s80, %s81
    %p93 = scmp.eq.s32.totalorder %s24, 1
    %p94 = por %p92, %p93
    %p96 = scmp.ne.s32.totalorder %s81, %s95
    %p97 = scmp.eq.s32.totalorder %s24, 0
    %p98 = por %p96, %p97
    %s100 = sadd.s32 %s99, 1
    %p103 = scmp.eq.s32.totalorder %s18, 1
    %p104 = scmp.ne.s32.totalorder %s99, %s101
    %p105 = scmp.eq.s32.totalorder %s18, 0
    %p106 = por %p104, %p105
    %p107 = scmp.ne.s32.totalorder %s99, %s101
    %p108 = scmp.eq.s32.totalorder %s23, 1
    %p109 = por %p107, %p108
    %p110 = scmp.ne.s32.totalorder %s101, %s102
    %p111 = scmp.eq.s32.totalorder %s23, 0
    %p112 = por %p110, %p111
    %p113 = scmp.ne.s32.totalorder %s101, %s102
    %p114 = scmp.eq.s32.totalorder %s24, 1
    %p115 = por %p113, %p114
    %p117 = scmp.ne.s32.totalorder %s102, %s116
    %p118 = scmp.eq.s32.totalorder %s24, 0
    %p119 = por %p117, %p118
    %s121 = sadd.s32 %s120, 1
    %p124 = scmp.eq.s32.totalorder %s18, 1
    %p125 = scmp.ne.s32.totalorder %s120, %s122
    %p126 = scmp.eq.s32.totalorder %s18, 0
    %p127 = por %p125, %p126
    %p128 = scmp.ne.s32.totalorder %s120, %s122
    %p129 = scmp.eq.s32.totalorder %s23, 1
    %p130 = por %p128, %p129
    %p131 = scmp.ne.s32.totalorder %s122, %s123
    %p132 = scmp.eq.s32.totalorder %s23, 0
    %p133 = por %p131, %p132
    %p134 = scmp.ne.s32.totalorder %s122, %s123
    %p135 = scmp.eq.s32.totalorder %s24, 1
    %p136 = por %p134, %p135
    %p138 = scmp.ne.s32.totalorder %s123, %s137
    %p139 = scmp.eq.s32.totalorder %s24, 0
    %p140 = por %p138, %p139
    %s142 = sadd.s32 %s141, 1
    %p145 = scmp.eq.s32.totalorder %s18, 1
    %p146 = scmp.ne.s32.totalorder %s141, %s143
    %p147 = scmp.eq.s32.totalorder %s18, 0
    %p148 = por %p146, %p147
    %p149 = scmp.ne.s32.totalorder %s141, %s143
    %p150 = scmp.eq.s32.totalorder %s23, 1
    %p151 = por %p149, %p150
    %p152 = scmp.ne.s32.totalorder %s143, %s144
    %p153 = scmp.eq.s32.totalorder %s23, 0
    %p154 = por %p152, %p153
    %p155 = scmp.ne.s32.totalorder %s143, %s144
    %p156 = scmp.eq.s32.totalorder %s24, 1
    %p157 = por %p155, %p156
    %p159 = scmp.ne.s32.totalorder %s144, %s158
    %p160 = scmp.eq.s32.totalorder %s24, 0
    %p161 = por %p159, %p160
    %s163 = sadd.s32 %s162, 1
    %p166 = scmp.eq.s32.totalorder %s18, 1
    %p167 = scmp.ne.s32.totalorder %s162, %s164
    %p168 = scmp.eq.s32.totalorder %s18, 0
    %p169 = por %p167, %p168
    %p170 = scmp.ne.s32.totalorder %s162, %s164
    %p171 = scmp.eq.s32.totalorder %s23, 1
    %p172 = por %p170, %p171
    %p173 = scmp.ne.s32.totalorder %s164, %s165
    %p174 = scmp.eq.s32.totalorder %s23, 0
    %p175 = por %p173, %p174
    %p176 = scmp.ne.s32.totalorder %s164, %s165
    %p177 = scmp.eq.s32.totalorder %s24, 1
    %p178 = por %p176, %p177
    %p180 = scmp.ne.s32.totalorder %s165, %s179
    %p181 = scmp.eq.s32.totalorder %s24, 0
    %p182 = por %p180, %p181
    %s184 = sadd.s32 %s183, 1
    %p187 = scmp.eq.s32.totalorder %s18, 1
    %p188 = scmp.ne.s32.totalorder %s183, %s185
    %p189 = scmp.eq.s32.totalorder %s18, 0
    %p190 = por %p188, %p189
    %p191 = scmp.ne.s32.totalorder %s183, %s185
    %p192 = scmp.eq.s32.totalorder %s23, 1
    %p193 = por %p191, %p192
    %p194 = scmp.ne.s32.totalorder %s185, %s186
    %p195 = scmp.eq.s32.totalorder %s23, 0
    %p196 = por %p194, %p195
    %p197 = scmp.ne.s32.totalorder %s185, %s186
    %p198 = scmp.eq.s32.totalorder %s24, 1
    %p199 = por %p197, %p198
    %p201 = scmp.ne.s32.totalorder %s186, %s200
    %p202 = scmp.eq.s32.totalorder %s24, 0
    %p203 = por %p201, %p202
    %s205 = sadd.s32 %s204, 1
    %p208 = scmp.eq.s32.totalorder %s18, 1
    %p209 = scmp.ne.s32.totalorder %s204, %s206
    %p210 = scmp.eq.s32.totalorder %s18, 0
    %p211 = por %p209, %p210
    %p212 = scmp.ne.s32.totalorder %s204, %s206
    %p213 = scmp.eq.s32.totalorder %s23, 1
    %p214 = por %p212, %p213
    %p215 = scmp.ne.s32.totalorder %s206, %s207
    %p216 = scmp.eq.s32.totalorder %s23, 0
    %p217 = por %p215, %p216
    %p218 = scmp.ne.s32.totalorder %s206, %s207
    %p219 = scmp.eq.s32.totalorder %s24, 1
    %p220 = por %p218, %p219
    %p222 = scmp.ne.s32.totalorder %s207, %s221
    %p223 = scmp.eq.s32.totalorder %s24, 0
    %p224 = por %p222, %p223
    %s226 = sadd.s32 %s225, 1
    %p229 = scmp.eq.s32.totalorder %s18, 1
    %p230 = scmp.ne.s32.totalorder %s225, %s227
    %p231 = scmp.eq.s32.totalorder %s18, 0
    %p232 = por %p230, %p231
    %p233 = scmp.ne.s32.totalorder %s225, %s227
    %p234 = scmp.eq.s32.totalorder %s23, 1
    %p235 = por %p233, %p234
    %p236 = scmp.ne.s32.totalorder %s227, %s228
    %p237 = scmp.eq.s32.totalorder %s23, 0
    %p238 = por %p236, %p237
    %p239 = scmp.ne.s32.totalorder %s227, %s228
    %p240 = scmp.eq.s32.totalorder %s24, 1
    %p241 = por %p239, %p240
    %p243 = scmp.ne.s32.totalorder %s228, %s242
    %p244 = scmp.eq.s32.totalorder %s24, 0
    %p245 = por %p243, %p244
    %s247 = sadd.s32 %s246, 1
    %p250 = scmp.eq.s32.totalorder %s18, 1
    %p251 = scmp.ne.s32.totalorder %s246, %s248
    %p252 = scmp.eq.s32.totalorder %s18, 0
    %p253 = por %p251, %p252
    %p254 = scmp.ne.s32.totalorder %s246, %s248
    %p255 = scmp.eq.s32.totalorder %s23, 1
    %p256 = por %p254, %p255
    %p257 = scmp.ne.s32.totalorder %s248, %s249
    %p258 = scmp.eq.s32.totalorder %s23, 0
    %p259 = por %p257, %p258
    %p260 = scmp.ne.s32.totalorder %s248, %s249
    %p261 = scmp.eq.s32.totalorder %s24, 1
    %p262 = por %p260, %p261
    %p264 = scmp.ne.s32.totalorder %s249, %s263
    %p265 = scmp.eq.s32.totalorder %s24, 0
    %p266 = por %p264, %p265
    %s268 = sadd.s32 %s267, 1
    %p271 = scmp.eq.s32.totalorder %s18, 1
    %p272 = scmp.ne.s32.totalorder %s267, %s269
    %p273 = scmp.eq.s32.totalorder %s18, 0
    %p274 = por %p272, %p273
    %p275 = scmp.ne.s32.totalorder %s267, %s269
    %p276 = scmp.eq.s32.totalorder %s23, 1
    %p277 = por %p275, %p276
    %p278 = scmp.ne.s32.totalorder %s269, %s270
    %p279 = scmp.eq.s32.totalorder %s23, 0
    %p280 = por %p278, %p279
    %p281 = scmp.ne.s32.totalorder %s269, %s270
    %p282 = scmp.eq.s32.totalorder %s24, 1
    %p283 = por %p281, %p282
    %p285 = scmp.ne.s32.totalorder %s270, %s284
    %p286 = scmp.eq.s32.totalorder %s24, 0
    %p287 = por %p285, %p286
    %s288 = ssub.s32 %s18, %s25
    %p289 = scmp.eq.s32.totalorder %s288, 0
    %s291 = sadd.s32 %s290, 1
    %s292 = scalar_select %p289, %s290, %s291
    %p295 = pneg %p289
    %p296 = scmp.eq.s32.totalorder %s18, 1
    %p297 = por %p295, %p296
    %p298 = scmp.ne.s32.totalorder %s290, %s293
    %p299 = scmp.eq.s32.totalorder %s18, 0
    %p300 = por %p298, %p299
    %p301 = scmp.ne.s32.totalorder %s290, %s293
    %p302 = scmp.eq.s32.totalorder %s23, 1
    %p303 = por %p301, %p302
    %p304 = scmp.ne.s32.totalorder %s293, %s294
    %p305 = scmp.eq.s32.totalorder %s23, 0
    %p306 = por %p304, %p305
    %p307 = scmp.ne.s32.totalorder %s293, %s294
    %p308 = scmp.eq.s32.totalorder %s24, 1
    %p309 = por %p307, %p308
    %p311 = scmp.ne.s32.totalorder %s294, %s310
    %p312 = scmp.eq.s32.totalorder %s24, 0
    %p313 = por %p311, %p312
    %p314 = scmp.le.s32.totalorder 1, %s18
    %p315 = scmp.lt.s32.totalorder %s18, 3
    %p316 = pnand %p314, %p315
    %p317 = pneg %p316
    // Predicated region
    $region9: #{tpu_custom_call.1} parent=5 // pred_check
      _
    $region10: #{tpu_custom_call.1} parent=5 // pred_check_branch
      %319 = sbr.rel (%p316) target = $region12
    $region11: #{tpu_custom_call.1} parent=5 // pred_region
      %s320 = ssub.s32 %s18, 1
      // Predicated region
      $region13: #{tpu_custom_call.1} parent=11 // pred_check
        %p321 = pneg %p91
      $region14: #{tpu_custom_call.1} parent=11 // pred_check_branch
        %323 = sbr.rel (%p321) target = $region16
      $region15: #{tpu_custom_call.1} parent=11 // pred_region
        _
      $region16: #{tpu_custom_call.1} parent=11 // pred_fallthru
        _
      // Predicated region
      $region17: #{tpu_custom_call.1} parent=11 // pred_check
        %p324 = pneg %p112
      $region18: #{tpu_custom_call.1} parent=11 // pred_check_branch
        %326 = sbr.rel (%p324) target = $region20
      $region19: #{tpu_custom_call.1} parent=11 // pred_region
        _
      $region20: #{tpu_custom_call.1} parent=11 // pred_fallthru
        _
      // Predicated region
      $region21: #{tpu_custom_call.1} parent=11 // pred_check
        %p327 = pneg %p133
      $region22: #{tpu_custom_call.1} parent=11 // pred_check_branch
        %329 = sbr.rel (%p327) target = $region24
      $region23: #{tpu_custom_call.1} parent=11 // pred_region
        _
      $region24: #{tpu_custom_call.1} parent=11 // pred_fallthru
        _
      // Predicated region
      $region25: #{tpu_custom_call.1} parent=11 // pred_check
        %p330 = pneg %p154
      $region26: #{tpu_custom_call.1} parent=11 // pred_check_branch
        %332 = sbr.rel (%p330) target = $region28
      $region27: #{tpu_custom_call.1} parent=11 // pred_region
        _
      $region28: #{tpu_custom_call.1} parent=11 // pred_fallthru
        _
      // Predicated region
      $region29: #{tpu_custom_call.1} parent=11 // pred_check
        %p333 = pneg %p175
      $region30: #{tpu_custom_call.1} parent=11 // pred_check_branch
        %335 = sbr.rel (%p333) target = $region32
      $region31: #{tpu_custom_call.1} parent=11 // pred_region
        _
      $region32: #{tpu_custom_call.1} parent=11 // pred_fallthru
        _
      // Predicated region
      $region33: #{tpu_custom_call.1} parent=11 // pred_check
        %p336 = pneg %p196
      $region34: #{tpu_custom_call.1} parent=11 // pred_check_branch
        %338 = sbr.rel (%p336) target = $region36
      $region35: #{tpu_custom_call.1} parent=11 // pred_region
        _
      $region36: #{tpu_custom_call.1} parent=11 // pred_fallthru
        _
      // Predicated region
      $region37: #{tpu_custom_call.1} parent=11 // pred_check
        %p339 = pneg %p217
      $region38: #{tpu_custom_call.1} parent=11 // pred_check_branch
        %341 = sbr.rel (%p339) target = $region40
      $region39: #{tpu_custom_call.1} parent=11 // pred_region
        _
      $region40: #{tpu_custom_call.1} parent=11 // pred_fallthru
        _
      // Predicated region
      $region41: #{tpu_custom_call.1} parent=11 // pred_check
        %p342 = pneg %p238
      $region42: #{tpu_custom_call.1} parent=11 // pred_check_branch
        %344 = sbr.rel (%p342) target = $region44
      $region43: #{tpu_custom_call.1} parent=11 // pred_region
        _
      $region44: #{tpu_custom_call.1} parent=11 // pred_fallthru
        _
      // Predicated region
      $region45: #{tpu_custom_call.1} parent=11 // pred_check
        %p345 = pneg %p259
      $region46: #{tpu_custom_call.1} parent=11 // pred_check_branch
        %347 = sbr.rel (%p345) target = $region48
      $region47: #{tpu_custom_call.1} parent=11 // pred_region
        _
      $region48: #{tpu_custom_call.1} parent=11 // pred_fallthru
        _
      // Predicated region
      $region49: #{tpu_custom_call.1} parent=11 // pred_check
        %p348 = pneg %p280
      $region50: #{tpu_custom_call.1} parent=11 // pred_check_branch
        %350 = sbr.rel (%p348) target = $region52
      $region51: #{tpu_custom_call.1} parent=11 // pred_region
        _
      $region52: #{tpu_custom_call.1} parent=11 // pred_fallthru
        _
    $region12: #{tpu_custom_call.1} parent=5 // pred_fallthru
      _
    %p351 = scmp.lt.s32.totalorder %s18, 2
    // Predicated region
    $region53: #{tpu_custom_call.1} parent=5 // pred_check
      %p352 = pneg %p351
    $region54: #{tpu_custom_call.1} parent=5 // pred_check_branch
      %354 = sbr.rel (%p352) target = $region56
    $region55: #{tpu_custom_call.1} parent=5 // pred_region
      // Predicated region
      $region57: #{tpu_custom_call.1} parent=55 // pred_check
        %p355 = pneg %p38
      $region58: #{tpu_custom_call.1} parent=55 // pred_check_branch
        %357 = sbr.rel (%p355) target = $region60
      $region59: #{tpu_custom_call.1} parent=55 // pred_region
        %s358 = smul.u32 2, %s18
        %p359 = scmp.lt.s32.totalorder %s358, 3
        %s360 = scalar_select %p359, %s358, 3
        %s361 = smul.addr %s360, 8
        %s362 = scalar_lea.vmem %s0, %s361
        %s363 = smul.u32 2, %s18
      $region60: #{tpu_custom_call.1} parent=55 // pred_fallthru
        _
      // Predicated region
      $region61: #{tpu_custom_call.1} parent=55 // pred_check
        %p364 = pneg %p64
      $region62: #{tpu_custom_call.1} parent=55 // pred_check_branch
        %366 = sbr.rel (%p364) target = $region64
      $region63: #{tpu_custom_call.1} parent=55 // pred_region
        %s367 = smul.u32 2, %s18
        %p368 = scmp.lt.s32.totalorder %s367, 3
        %s369 = scalar_select %p368, %s367, 3
        %s370 = smul.addr %s369, 8
        %s371 = scalar_lea.vmem %s1, %s370
        %s372 = smul.u32 2, %s18
      $region64: #{tpu_custom_call.1} parent=55 // pred_fallthru
        _
    $region56: #{tpu_custom_call.1} parent=5 // pred_fallthru
      _
    %p373 = scmp.le.s32.totalorder 1, %s18
    %p374 = scmp.lt.s32.totalorder %s18, 3
    %p375 = pnand %p373, %p374
    %p376 = pneg %p375
    // Predicated region
    $region65: #{tpu_custom_call.1} parent=5 // pred_check
      _
    $region66: #{tpu_custom_call.1} parent=5 // pred_check_branch
      %378 = sbr.rel (%p375) target = $region68
    $region67: #{tpu_custom_call.1} parent=5 // pred_region
      %s379 = ssub.s32 %s18, 1
      %s380 = smul.u32 2, %s23
      %p381 = scmp.lt.s32.totalorder %s380, 3
      %s382 = scalar_select %p381, %s380, 3
      %s383 = smul.addr %s382, 8
      %s384 = scalar_lea.vmem %s0, %s383
      %p385 = pneg %p44
      %p386 = pneg %p41
      %s387 = smul.u32 2, %s23
      %p388 = scmp.lt.s32.totalorder %s387, 3
      %s389 = scalar_select %p388, %s387, 3
      %s390 = smul.addr %s389, 8
      %s391 = scalar_lea.vmem %s1, %s390
      %p392 = pneg %p70
      %p393 = pneg %p67
      %p394 = pneg %p91
      %p395 = pneg %p88
      %p396 = pneg %p112
      %p397 = pneg %p109
      %p398 = pneg %p133
      %p399 = pneg %p130
      %p400 = pneg %p154
      %p401 = pneg %p151
      %p402 = pneg %p175
      %p403 = pneg %p172
      %p404 = pneg %p196
      %p405 = pneg %p193
      %p406 = pneg %p217
      %p407 = pneg %p214
      %p408 = pneg %p238
      %p409 = pneg %p235
      %p410 = pneg %p259
      %p411 = pneg %p256
      %p412 = pneg %p280
      %p413 = pneg %p277
      %p414 = pneg %p306
      %p415 = pneg %p303
      %s416 = smul.u32 2, %s23
      %p417 = scmp.lt.s32.totalorder %s416, 3
      %s418 = scalar_select %p417, %s416, 3
      %s419 = smul.addr %s418, 8
      %s420 = scalar_lea.vmem %s12, %s419
      %s421 = smul.u32 2, %s23
      %p422 = scmp.lt.s32.totalorder %s421, 3
      %s423 = scalar_select %p422, %s421, 3
      %s424 = smul.addr %s423, 8
      %s425 = scalar_lea.vmem %s0, %s424
      %s426 = smul.u32 2, %s23
      %s427 = smul.u32 2, %s23
      %p428 = scmp.lt.s32.totalorder %s427, 3
      %s429 = scalar_select %p428, %s427, 3
      %s430 = smul.addr %s429, 8
      %s431 = scalar_lea.vmem %s1, %s430
      %s432 = smul.u32 2, %s23
      %s433 = smul.u32 2, %s23
      %p434 = scmp.lt.s32.totalorder %s433, 3
      %s435 = scalar_select %p434, %s433, 3
      %s436 = smul.addr %s435, 8
      %s437 = scalar_lea.vmem %s12, %s436
      %s438 = smul.u32 2, %s23
      %v440 = vld [vmem:[%s431] sm:$0xff]
      %v441 = vld [vmem:[%s431 + $0x8] sm:$0xff]
      %v442 = vlaneseq
      %v443 = vand.u32 %v442, 127
      %444 = vset.pattern.permute.xlu0 0
      %445 = vperm.xlu0 %444, %v440
      %v446 = vpop.permute.xlu0 %445
      %447 = vset.pattern.permute.xlu0 0
      %448 = vperm.xlu0 %447, %v441
      %v449 = vpop.permute.xlu0 %448
      %vm450 = vcmp.eq.s32.totalorder %v446, %v443
      %vm451 = vcmp.eq.s32.totalorder %v449, %v443
      %v452 = vsel %vm450, 1, 0
      %v453 = vsel %vm451, 1, 0
      %v454 = vcvt.s32.f32 %v452
      %v455 = vcvt.s32.f32 %v453
      %v456 = vld [vmem:[%s425] sm:$0xff]
      %v457 = vld [vmem:[%s425 + $0x8] sm:$0xff]
      %v458 = vld [vmem:[%s2] sm:$0xff]
      %v459 = vld [vmem:[%s2 + $0x8] sm:$0x3]
      %vm460 = vcmask 80896
      %v462 = vsel %vm460, %v454, 0
      %v465 = vsel %vm460, %v455, 0
      %vm467 = vcmask 1041408
      %v469 = vsel %vm467, %v459, 0
      %471 = vmatpush.msra.mxu0 0.0
      %472 = vmatpush.msra.mxu0 0.0
      %473 = vmatpush.msra.mxu0 0.0
      %474 = vmatpush.msra.mxu0 0.0
      %475 = vmatpush.msra.mxu0 0.0
      %476 = vmatpush.msra.mxu0 0.0
      %477 = vmatpush.msra.mxu0 0.0
      %478 = vmatpush.msra.mxu0 0.0
      %479 = vmatpush.msra.mxu0 0.0
      %480 = vmatpush.msra.mxu0 0.0
      %481 = vmatpush.msra.mxu0 0.0
      %482 = vmatpush.msra.mxu0 0.0
      %483 = vmatpush.msra.mxu0 0.0
      %484 = vmatpush.msra.mxu0 0.0
      %485 = vmatpush.msra.mxu0 %v469
      %486 = vmatpush.msra.mxu0 %v458
      %487 = vmatmul.f32.gmra.mxu0 %v462
      %v488 = vpop.f32.mrf.mxu0
      %v489 = vadd.f32 0.0, %v488
      %490 = vmatmul.f32.gmra.mxu0 %v465
      %v491 = vpop.f32.mrf.mxu0
      %v492 = vadd.f32 0.0, %v491
      %493 = vdwg.mxu0
      %v494 = vadd.f32 %v456, %v489
      %v495 = vadd.f32 %v457, %v492
      %v496 = vld [vmem:[%s3] sm:$0x3]
      %v497 = vld [vmem:[%s4] sm:$0x3]
      %v498 = vperm.slane %v496, 0
      %v499 = vmul.f32 %v494, %v498
      %v500 = vmul.f32 %v495, %v498
      %vm501 = vcmask 97280
      %v502 = vsel %vm501, %v499, 0.0
      %503 = vadd.xlane.f32.xlu0 %v502
      %v504 = vpop.xlane.xlu0 %503
      %v505 = vsel %vm501, %v500, 0.0
      %506 = vadd.xlane.f32.xlu0 %v505
      %v507 = vpop.xlane.xlu0 %506
      %v508 = vmul.f32 %v494, %v504
      %v509 = vmul.f32 %v495, %v507
      %v510 = vperm.slane %v497, 0
      %v511 = vadd.f32 %v508, %v510
      %v512 = vadd.f32 %v509, %v510
      %v513 = vadd.f32 %v511, %v494
      %v514 = vadd.f32 %v512, %v495
      %v515 = vperm.slane %v496, 1
      %v516 = vmul.f32 %v513, %v515
      %v517 = vmul.f32 %v514, %v515
      %v518 = vsel %vm501, %v516, 0.0
      %519 = vadd.xlane.f32.xlu0 %v518
      %v520 = vpop.xlane.xlu0 %519
      %v521 = vsel %vm501, %v517, 0.0
      %522 = vadd.xlane.f32.xlu0 %v521
      %v523 = vpop.xlane.xlu0 %522
      %v524 = vmul.f32 %v494, %v520
      %v525 = vmul.f32 %v495, %v523
      %v526 = vperm.slane %v497, 1
      %v527 = vadd.f32 %v524, %v526
      %v528 = vadd.f32 %v525, %v526
      %v529 = vadd.f32 %v527, %v513
      %v530 = vadd.f32 %v528, %v514
      %v531 = vpack.c.bf16 %v495, %v494
      %v532 = vld [vmem:[%s5] sm:$0xf]
      %v533 = vld [vmem:[%s5 + $0x4] sm:$0x3]
      %v534 = vld [vmem:[%s6] sm:$0x1]
      %v536 = vperm.slane %v534, 0
      %v540 = vunpack.c.l.b16 %v532
      %v541 = vunpack.c.l.b16 %v533
      %v542 = vpack.c.b16 %v541, %v540
      %v544 = vsel %vm501, %v531, 0
      %vm546 = vcmask 1045504
      %v548 = vsel %vm546, %v542, 0
      %550 = vmatpush.bf16.msra.mxu0 0
      %551 = vmatpush.bf16.msra.mxu0 0
      %552 = vmatpush.bf16.msra.mxu0 0
      %553 = vmatpush.bf16.msra.mxu0 0
      %554 = vmatpush.bf16.msra.mxu0 0
      %555 = vmatpush.bf16.msra.mxu0 0
      %556 = vmatpush.bf16.msra.mxu0 0
      %557 = vmatpush.bf16.msra.mxu0 %v548
      %558 = vmatmul.bf16.gmra.mxu0 %v544
      %v559 = vpop.f32.mrf.mxu0
      %v560 = vadd.f32 %v536, %v559
      %v561 = vpop.f32.mrf.mxu0
      %v562 = vadd.f32 %v536, %v561
      %563 = vdwg.mxu0
      %v564 = vmax.f32 %v560, 0.0
      %v565 = vmax.f32 %v562, 0.0
      %v566 = vpack.c.bf16 %v565, %v564
      %v567 = vld [vmem:[%s7] sm:$0xf]
      %v568 = vld [vmem:[%s7 + $0x4] sm:$0xf]
      %v569 = vld [vmem:[%s7 + $0x8] sm:$0xf]
      %v570 = vld [vmem:[%s7 + $0xc] sm:$0xf]
      %v571 = vld [vmem:[%s7 + $0x10] sm:$0xf]
      %v572 = vld [vmem:[%s7 + $0x14] sm:$0xf]
      %v573 = vld [vmem:[%s7 + $0x18] sm:$0xf]
      %v574 = vld [vmem:[%s7 + $0x1c] sm:$0xf]
      %v575 = vld [vmem:[%s8] sm:$0x1]
      %v577 = vperm.slane %v575, 0
      %v587 = vunpack.c.l.b16 %v567
      %v588 = vunpack.c.l.b16 %v568
      %v589 = vunpack.c.l.b16 %v569
      %v590 = vunpack.c.l.b16 %v570
      %v591 = vunpack.c.l.b16 %v571
      %v592 = vunpack.c.l.b16 %v572
      %v593 = vunpack.c.l.b16 %v573
      %v594 = vunpack.c.l.b16 %v574
      %v595 = vpack.c.b16 %v588, %v587
      %v596 = vpack.c.b16 %v590, %v589
      %v597 = vpack.c.b16 %v592, %v591
      %v598 = vpack.c.b16 %v594, %v593
      %vm603 = vcmask 523264
      %v605 = vsel %vm603, %v566, 0
      %607 = vmatpush.bf16.msra.mxu0 0
      %608 = vmatpush.bf16.msra.mxu0 0
      %609 = vmatpush.bf16.msra.mxu0 0
      %610 = vmatpush.bf16.msra.mxu0 0
      %611 = vmatpush.bf16.msra.mxu0 %v598
      %612 = vmatpush.bf16.msra.mxu0 %v597
      %613 = vmatpush.bf16.msra.mxu0 %v596
      %614 = vmatpush.bf16.msra.mxu0 %v595
      %615 = vmatmul.bf16.gmra.mxu0 %v605
      %v616 = vpop.f32.mrf.mxu0
      %v617 = vadd.f32 %v577, %v616
      %v618 = vpop.f32.mrf.mxu0
      %v619 = vadd.f32 %v577, %v618
      %620 = vdwg.mxu0
      %v621 = vmax.f32 %v617, 0.0
      %v622 = vmax.f32 %v619, 0.0
      %v623 = vpack.c.bf16 %v530, %v529
      %v624 = vld [vmem:[%s9] sm:$0xf]
      %v625 = vld [vmem:[%s9 + $0x4] sm:$0x3]
      %v626 = vpack.c.bf16 %v622, %v621
      %v627 = vld [vmem:[%s10] sm:$0xf]
      %v628 = vld [vmem:[%s10 + $0x4] sm:$0xf]
      %v629 = vld [vmem:[%s10 + $0x8] sm:$0xf]
      %v630 = vld [vmem:[%s10 + $0xc] sm:$0xf]
      %v635 = vunpack.c.l.b16 %v627
      %v636 = vunpack.c.l.b16 %v628
      %v637 = vunpack.c.l.b16 %v629
      %v638 = vunpack.c.l.b16 %v630
      %v639 = vpack.c.b16 %v636, %v635
      %v640 = vpack.c.b16 %v638, %v637
      %vm643 = vcmask 261120
      %v645 = vsel %vm643, %v626, 0
      %647 = vmatpush.bf16.msra.mxu0 0
      %648 = vmatpush.bf16.msra.mxu0 0
      %649 = vmatpush.bf16.msra.mxu0 0
      %650 = vmatpush.bf16.msra.mxu0 0
      %651 = vmatpush.bf16.msra.mxu0 0
      %652 = vmatpush.bf16.msra.mxu0 0
      %653 = vmatpush.bf16.msra.mxu0 %v640
      %654 = vmatpush.bf16.msra.mxu0 %v639
      %655 = vmatmul.bf16.gmra.mxu0 %v645
      %v656 = vpop.f32.mrf.mxu0
      %v657 = vadd.f32 0.0, %v656
      %v658 = vpop.f32.mrf.mxu0
      %v659 = vadd.f32 0.0, %v658
      %660 = vdwg.mxu0
      %v663 = vunpack.c.l.b16 %v624
      %v664 = vunpack.c.l.b16 %v625
      %v665 = vpack.c.b16 %v664, %v663
      %v667 = vsel %vm501, %v623, 0
      %v670 = vsel %vm546, %v665, 0
      %672 = vmatpush.bf16.msra.mxu0 0
      %673 = vmatpush.bf16.msra.mxu0 0
      %674 = vmatpush.bf16.msra.mxu0 0
      %675 = vmatpush.bf16.msra.mxu0 0
      %676 = vmatpush.bf16.msra.mxu0 0
      %677 = vmatpush.bf16.msra.mxu0 0
      %678 = vmatpush.bf16.msra.mxu0 0
      %679 = vmatpush.bf16.msra.mxu0 %v670
      %680 = vmatmul.bf16.gmra.mxu0 %v667
      %v681 = vpop.f32.mrf.mxu0
      %v682 = vadd.f32 %v657, %v681
      %v683 = vpop.f32.mrf.mxu0
      %v684 = vadd.f32 %v659, %v683
      %685 = vdwg.mxu0
      %v686 = vld [vmem:[%s11] sm:$0x1]
      %v688 = vperm.slane %v686, 0
      %v690 = vadd.f32 %v682, %v688
      %v691 = vadd.f32 %v684, %v688
      %v692 = vxor.u32 %v690, 2147483648
      %v693 = vxor.u32 %v691, 2147483648
      %v694 = vmul.f32 %v692, 1.442695
      %v695 = vpow.pop %v694
      %v696 = vmul.f32 %v693, 1.442695
      %v697 = vpow.pop %v696
      %v698 = vadd.f32 %v695, 1.0
      %v699 = vadd.f32 %v697, 1.0
      %v700 = vrcp.pop %v698
      %v701 = vmul.f32 %v698, %v700
      %v702 = vsub.f32 1.0, %v701
      %v703 = vmul.f32 %v700, %v702
      %v704 = vadd.f32 %v700, %v703
      %vm705 = vweird.f32 %v698
      %vm706 = vweird.f32 %v700
      %vm707 = vmor %vm705, %vm706
      %v708 = vsel %vm707, %v700, %v704
      %v709 = vand.u32 2147483647, %v698
      %vm710 = vcmp.eq.f32.partialorder %v709, 8.507059e+37
      %v711 = vand.u32 %v698, 2147483648
      %v712 = vor.u32 1.1754944e-38, %v711
      %v713 = vsel %vm710, %v712, %v708
      %v714 = vmul.f32 1.0, %v713
      %v715 = vrcp.pop %v699
      %v716 = vmul.f32 %v699, %v715
      %v717 = vsub.f32 1.0, %v716
      %v718 = vmul.f32 %v715, %v717
      %v719 = vadd.f32 %v715, %v718
      %vm720 = vweird.f32 %v699
      %vm721 = vweird.f32 %v715
      %vm722 = vmor %vm720, %vm721
      %v723 = vsel %vm722, %v715, %v719
      %v724 = vand.u32 2147483647, %v699
      %vm725 = vcmp.eq.f32.partialorder %v724, 8.507059e+37
      %v726 = vand.u32 %v699, 2147483648
      %v727 = vor.u32 1.1754944e-38, %v726
      %v728 = vsel %vm725, %v727, %v723
      %v729 = vmul.f32 1.0, %v728
      %vm730 = vcmask 64512
      %731 = vst.msk [vmem:[%s437] sm:$0xff] %vm730, %v714
      %732 = vst.msk [vmem:[%s437 + $0x8] sm:$0xff] %vm730, %v729
      %s733 = smul.u32 2, %s23
      %p734 = scmp.lt.s32.totalorder %s733, 3
      %s735 = scalar_select %p734, %s733, 3
      %s736 = smul.addr %s735, 8
      %s737 = scalar_lea.vmem %s12, %s736
      // Predicated region
      $region69: #{tpu_custom_call.1} parent=67 // pred_check
        %p738 = pneg %p303
      $region70: #{tpu_custom_call.1} parent=67 // pred_check_branch
        %740 = sbr.rel (%p738) target = $region72
      $region71: #{tpu_custom_call.1} parent=67 // pred_region
        %s741 = smul.u32 2, %s23
      $region72: #{tpu_custom_call.1} parent=67 // pred_fallthru
        _
    $region68: #{tpu_custom_call.1} parent=5 // pred_fallthru
      _
    %p742 = scmp.le.s32.totalorder 2, %s18
    // Predicated region
    $region73: #{tpu_custom_call.1} parent=5 // pred_check
      %p743 = pneg %p742
    $region74: #{tpu_custom_call.1} parent=5 // pred_check_branch
      %745 = sbr.rel (%p743) target = $region76
    $region75: #{tpu_custom_call.1} parent=5 // pred_region
      %s746 = ssub.s32 %s18, 2
      // Predicated region
      $region77: #{tpu_custom_call.1} parent=75 // pred_check
        %p747 = pneg %p309
      $region78: #{tpu_custom_call.1} parent=75 // pred_check_branch
        %749 = sbr.rel (%p747) target = $region80
      $region79: #{tpu_custom_call.1} parent=75 // pred_region
        %s750 = smul.u32 2, %s24
        %p751 = scmp.lt.s32.totalorder %s750, 3
        %s752 = scalar_select %p751, %s750, 3
        %s753 = smul.addr %s752, 8
        %s754 = scalar_lea.vmem %s12, %s753
      $region80: #{tpu_custom_call.1} parent=75 // pred_fallthru
        _
    $region76: #{tpu_custom_call.1} parent=5 // pred_fallthru
      _
  $region6: #{tpu_custom_call.1} parent=0 // loop_footer
    %s22 = sadd.s32 1, %s18
  $region7: #{tpu_custom_call.1} parent=0 // loop_footer_branch
    %17 = sbr.rel target = $region3
  $region8: #{tpu_custom_call.1} parent=0 // loop_exit
    _

</llo_original>
